<compile_context>
chip_gen: v7x
topology: tpu7x:2x2x1
jax: 0.10.0
libtpu: 0.0.40
codegen_flags: <defaults>
</compile_context>

<pallas_src>
import functools

import jax
import jax.numpy as jnp
from jax.experimental import pallas as pl
from jax.experimental.pallas import tpu as pltpu


def _temporal_block_kernel(x_ref, w1_ref, b1_ref, w2_ref, b2_ref, *rest,
                           K, dil, pad, L, C_out, B_tile,
                           fuse1, fuse2, has_downsample):
    if has_downsample:
        wd_ref, bd_ref, o_ref = rest
    else:
        (o_ref,) = rest

    BL = B_tile * L

    # ---- hoisted once per grid step ----
    w1 = w1_ref[...] if fuse1 else [w1_ref[k] for k in range(K)]
    w2 = w2_ref[...] if fuse2 else [w2_ref[k] for k in range(K)]
    b1 = jnp.broadcast_to(b1_ref[...], (C_out, BL))
    b2 = jnp.broadcast_to(b2_ref[...], (C_out, BL))
    if has_downsample:
        wd = wd_ref[...]                                    # (C_out, C_in)
        bd = jnp.broadcast_to(bd_ref[...], (C_out, BL))

    # Flatten the batch tile onto the lane axis: (C_in, B_tile*L).
    x3 = x_ref[...].astype(jnp.float32)                     # (B_tile, C_in, L)
    if B_tile == 1:
        x_all = x3[0]
    else:
        x_all = jnp.concatenate([x3[b] for b in range(B_tile)], axis=-1)

    # Per-tap validity masks (sample-local zero halo), shared by both convs.
    shifts = [k * dil - pad for k in range(K)]
    masks = {}
    needed = [s for s in shifts if s != 0 and abs(s) < L]
    if needed:
        pos = jax.lax.broadcasted_iota(jnp.int32, (1, BL), 1) % L
        for s in needed:
            masks[s] = (pos + s >= 0) & (pos + s < L)

    def shift_tap(x2d, s):
        # y[:, b*L + t] = x2d[:, b*L + t + s] if 0 <= t+s < L else 0.
        C = x2d.shape[0]
        if s == 0:
            return x2d
        if abs(s) >= L:
            return jnp.zeros((C, BL), jnp.float32)
        if s > 0:
            y = jnp.concatenate(
                [x2d[:, s:], jnp.zeros((C, s), jnp.float32)], axis=-1)
        else:
            y = jnp.concatenate(
                [jnp.zeros((C, -s), jnp.float32), x2d[:, :BL + s]], axis=-1)
        return jnp.where(masks[s], y, 0.0)

    def conv_relu(x2d, w, bias, fused):
        taps = [shift_tap(x2d, s) for s in shifts]
        if fused:
            # Single MXU call: contraction depth K*C, N-dim B_tile*L.
            stacked = jnp.concatenate(taps, axis=0) if K > 1 else taps[0]
            y = jnp.dot(w, stacked, preferred_element_type=jnp.float32) + bias
        else:
            # Per-tap path (contiguous 2-D weight tiles); bias seeds the acc.
            y = bias
            for k in range(K):
                y = y + jnp.dot(w[k], taps[k],
                                preferred_element_type=jnp.float32)
        return jnp.maximum(y, 0.0)

    h1 = conv_relu(x_all, w1, b1, fuse1)          # conv1 + relu (+ dropout p=0)
    h2 = conv_relu(h1, w2, b2, fuse2)             # conv2 + relu (+ dropout p=0)
    if has_downsample:
        res = jnp.dot(wd, x_all, preferred_element_type=jnp.float32) + bd
    else:
        res = x_all
    o_ref[0] = jnp.maximum(h2 + res, 0.0).astype(o_ref.dtype)


def _pick_batch_tile(N, L, max_tile=8):
    """Pick how many batch elements to flatten onto the lane axis per step.

    L already a multiple of 128 -> lane dense per sample, keep B_tile=1 (max
    grid parallelism, no wrapper relayout).  Otherwise pack samples until
    B_tile*L ~ 256 lanes (capped), restricted to divisors of N."""
    if L % 128 == 0:
        return 1
    cap = min(max_tile, max(1, -(-256 // L)))
    best = 1
    for d in range(1, min(N, cap) + 1):
        if N % d == 0:
            best = d
    return best


def temporal_block(x, params, *, kernel_size, dilation, stride=1):
    """x: (N, C_in, L) float32.  params: PyTorch-layout conv weights/biases."""
    assert stride == 1, "stride must be 1 for the residual add (as in the module)"
    N, C_in, L = x.shape
    C_out, _, K = params["w1"].shape
    assert K == kernel_size
    assert K % 2 == 1, "even kernel_size breaks the residual add in the module"
    dil = dilation
    pad = (K - 1) // 2 * dil
    has_downsample = C_in != C_out

    # Fused-tap matmul only when the per-tap channel count is sublane-aligned
    # (f32 sublane tile = 8); otherwise per-tap 2-D weight tiles.
    fuse1 = (C_in % 8 == 0)
    fuse2 = (C_out % 8 == 0)

    if fuse1:
        w1_arg = jnp.transpose(params["w1"], (0, 2, 1)).reshape(C_out, K * C_in)
    else:
        w1_arg = jnp.transpose(params["w1"], (2, 0, 1))        # (K, C_out, C_in)
    if fuse2:
        w2_arg = jnp.transpose(params["w2"], (0, 2, 1)).reshape(C_out, K * C_out)
    else:
        w2_arg = jnp.transpose(params["w2"], (2, 0, 1))        # (K, C_out, C_out)
    b1 = params["b1"].reshape(C_out, 1)
    b2 = params["b2"].reshape(C_out, 1)

    B_tile = _pick_batch_tile(N, L)
    G = N // B_tile
    BL = B_tile * L
    grid = (G,)

    kernel = functools.partial(
        _temporal_block_kernel,
        K=K, dil=dil, pad=pad, L=L, C_out=C_out, B_tile=B_tile,
        fuse1=fuse1, fuse2=fuse2, has_downsample=has_downsample)

    def rep(shape):
        return pl.BlockSpec(shape, lambda g: (0,) * len(shape))

    in_specs = [
        pl.BlockSpec((B_tile, C_in, L), lambda g: (g, 0, 0)),   # x (unpadded)
        rep(w1_arg.shape),                                      # w1
        rep((C_out, 1)),                                        # b1
        rep(w2_arg.shape),                                      # w2
        rep((C_out, 1)),                                        # b2
    ]
    args = [x, w1_arg, b1, w2_arg, b2]
    if has_downsample:
        wd = params["wd"].reshape(C_out, C_in)
        bd = params["bd"].reshape(C_out, 1)
        in_specs += [rep((C_out, C_in)), rep((C_out, 1))]
        args += [wd, bd]

    # Advisory cost estimate (helps XLA schedule around the custom call).
    flops = 2 * N * L * (C_out * K * C_in + C_out * K * C_out)
    if has_downsample:
        flops += 2 * N * L * C_out * C_in
    bytes_accessed = 4 * (N * C_in * L + N * C_out * L
                          + C_out * C_in * K + C_out * C_out * K + 2 * C_out
                          + (C_out * C_in + C_out if has_downsample else 0))

    # Per-step VMEM: double-buffered blocks + replicated weights + in-body
    # temporaries, with headroom; clamped to stay well inside v7x's 64 MiB.
    act_block_bytes = 4 * (B_tile * C_in * L + C_out * BL)
    tmp_bytes = 4 * BL * ((K + 1) * max(C_in, C_out) + 3 * C_out)
    weight_bytes = 4 * (C_out * C_in * K + C_out * C_out * K + 2 * C_out
                        + (C_out * C_in + C_out if has_downsample else 0))
    vmem_limit = int(min(max(32 * 2 ** 20,
                             4 * act_block_bytes + 2 * weight_bytes
                             + 2 * tmp_bytes),
                         48 * 2 ** 20))

    out_packed = pl.pallas_call(
        kernel,
        out_shape=jax.ShapeDtypeStruct((G, C_out, BL), x.dtype),
        grid_spec=pltpu.PrefetchScalarGridSpec(
            num_scalar_prefetch=0,
            grid=grid,
            in_specs=in_specs,
            out_specs=pl.BlockSpec((1, C_out, BL), lambda g: (g, 0, 0)),
        ),
        compiler_params=pltpu.CompilerParams(
            dimension_semantics=("parallel",),
            vmem_limit_bytes=vmem_limit),
        cost_estimate=pl.CostEstimate(
            flops=int(flops), transcendentals=0,
            bytes_accessed=int(bytes_accessed)),
    )(*args)

    # Un-pack the lane-flattened batch tile.  For B_tile == 1 this is a free
    # bitcast; for small-L packing it is one cheap relayout of the output.
    out = jnp.transpose(out_packed.reshape(G, C_out, B_tile, L),
                        (0, 2, 1, 3)).reshape(N, C_out, L)
    return out


def _reference(x, params, *, kernel_size, dilation):
    """Plain-JAX reference (lax conv) matching the PyTorch module forward."""
    pad = (kernel_size - 1) // 2 * dilation
    dn = jax.lax.conv_dimension_numbers(x.shape, params["w1"].shape,
                                        ("NCH", "OIH", "NCH"))

    def conv(inp, w, b, d, p):
        y = jax.lax.conv_general_dilated(inp, w, window_strides=(1,),
                                         padding=[(p, p)], rhs_dilation=(d,),
                                         dimension_numbers=dn)
        return y + b.reshape(1, -1, 1)

    h1 = jax.nn.relu(conv(x, params["w1"], params["b1"], dilation, pad))
    h2 = jax.nn.relu(conv(h1, params["w2"], params["b2"], dilation, pad))
    C_in, C_out = x.shape[1], params["w1"].shape[0]
    if C_in != C_out:
        res = conv(x, params["wd"], params["bd"], 1, 0)
    else:
        res = x
    return jax.nn.relu(h2 + res)


if __name__ == "__main__":
    # Small shapes consistent with the module's forward.
    N, C_in, C_out, L = 2, 4, 8, 16
    kernel_size, stride, dilation = 3, 1, 2   # stride must be 1 for the residual add

    key = jax.random.PRNGKey(0)
    k_x, k_w1, k_b1, k_w2, k_b2, k_wd, k_bd = jax.random.split(key, 7)

    x = jax.random.normal(k_x, (N, C_in, L), jnp.float32)

    def init(k, shape, fan_in):
        bound = 1.0 / (fan_in ** 0.5)
        return jax.random.uniform(k, shape, jnp.float32, -bound, bound)

    params = {
        "w1": init(k_w1, (C_out, C_in, kernel_size), C_in * kernel_size),
        "b1": init(k_b1, (C_out,), C_in * kernel_size),
        "w2": init(k_w2, (C_out, C_out, kernel_size), C_out * kernel_size),
        "b2": init(k_b2, (C_out,), C_out * kernel_size),
        "wd": init(k_wd, (C_out, C_in, 1), C_in),   # 1x1 downsample (C_in != C_out)
        "bd": init(k_bd, (C_out,), C_in),
    }

    out = temporal_block(x, params, kernel_size=kernel_size,
                         dilation=dilation, stride=stride)
    out = jax.block_until_ready(out)

    ref = _reference(x, params, kernel_size=kernel_size, dilation=dilation)
    assert out.shape == (N, C_out, L)
    assert jnp.max(jnp.abs(out - ref)) < 1e-4, "mismatch vs reference"

    print("KERNEL_OK")
</pallas_src>

<mosaic_0001>
module attributes {stable_mosaic.version = 11 : i64} {
  func.func @_temporal_block_kernel(%arg0: i32, %arg1: memref<2x4x16xf32, #tpu.memory_space<vmem>>, %arg2: memref<3x8x4xf32, #tpu.memory_space<vmem>>, %arg3: memref<8x1xf32, #tpu.memory_space<vmem>>, %arg4: memref<8x24xf32, #tpu.memory_space<vmem>>, %arg5: memref<8x1xf32, #tpu.memory_space<vmem>>, %arg6: memref<8x4xf32, #tpu.memory_space<vmem>>, %arg7: memref<8x1xf32, #tpu.memory_space<vmem>>, %arg8: memref<1x8x32xf32, #tpu.memory_space<vmem>>) attributes {dimension_semantics = [#tpu.dimension_semantics<parallel>], iteration_bounds = array<i64: 1>, scalar_prefetch = 0 : i64, scratch_operands = 0 : i64, tpu.core_type = #tpu.core_type<tc>, window_params = [{transform_indices = @transform_0, window_bounds = array<i64: 2, 4, 16>}, {pipeline_mode = #tpu.pipeline_mode<synchronous>, transform_indices = @transform_1, window_bounds = array<i64: 3, 8, 4>}, {pipeline_mode = #tpu.pipeline_mode<synchronous>, transform_indices = @transform_2, window_bounds = array<i64: 8, 1>}, {pipeline_mode = #tpu.pipeline_mode<synchronous>, transform_indices = @transform_3, window_bounds = array<i64: 8, 24>}, {pipeline_mode = #tpu.pipeline_mode<synchronous>, transform_indices = @transform_4, window_bounds = array<i64: 8, 1>}, {pipeline_mode = #tpu.pipeline_mode<synchronous>, transform_indices = @transform_5, window_bounds = array<i64: 8, 4>}, {pipeline_mode = #tpu.pipeline_mode<synchronous>, transform_indices = @transform_6, window_bounds = array<i64: 8, 1>}, {transform_indices = @transform_7, window_bounds = array<i64: 1, 8, 32>}]} {
    %c0 = arith.constant 0 : index
    %c0_0 = arith.constant 0 : index
    %c0_1 = arith.constant 0 : index
    %0 = vector.load %arg2[%c0, %c0_0, %c0_1] : memref<3x8x4xf32, #tpu.memory_space<vmem>>, vector<1x8x4xf32>
    %1 = vector.shape_cast %0 : vector<1x8x4xf32> to vector<8x4xf32>
    %c1 = arith.constant 1 : index
    %c0_2 = arith.constant 0 : index
    %c0_3 = arith.constant 0 : index
    %2 = vector.load %arg2[%c1, %c0_2, %c0_3] : memref<3x8x4xf32, #tpu.memory_space<vmem>>, vector<1x8x4xf32>
    %3 = vector.shape_cast %2 : vector<1x8x4xf32> to vector<8x4xf32>
    %c2 = arith.constant 2 : index
    %c0_4 = arith.constant 0 : index
    %c0_5 = arith.constant 0 : index
    %4 = vector.load %arg2[%c2, %c0_4, %c0_5] : memref<3x8x4xf32, #tpu.memory_space<vmem>>, vector<1x8x4xf32>
    %5 = vector.shape_cast %4 : vector<1x8x4xf32> to vector<8x4xf32>
    %c0_6 = arith.constant 0 : index
    %c0_7 = arith.constant 0 : index
    %6 = vector.load %arg4[%c0_6, %c0_7] : memref<8x24xf32, #tpu.memory_space<vmem>>, vector<8x24xf32>
    %c0_8 = arith.constant 0 : index
    %c0_9 = arith.constant 0 : index
    %7 = vector.load %arg3[%c0_8, %c0_9] : memref<8x1xf32, #tpu.memory_space<vmem>>, vector<8x1xf32>
    %8 = vector.shape_cast %7 : vector<8x1xf32> to vector<8x1xf32>
    %9 = vector.broadcast %8 : vector<8x1xf32> to vector<8x32xf32>
    %c0_10 = arith.constant 0 : index
    %c0_11 = arith.constant 0 : index
    %10 = vector.load %arg5[%c0_10, %c0_11] : memref<8x1xf32, #tpu.memory_space<vmem>>, vector<8x1xf32>
    %11 = vector.shape_cast %10 : vector<8x1xf32> to vector<8x1xf32>
    %12 = vector.broadcast %11 : vector<8x1xf32> to vector<8x32xf32>
    %c0_12 = arith.constant 0 : index
    %c0_13 = arith.constant 0 : index
    %13 = vector.load %arg6[%c0_12, %c0_13] : memref<8x4xf32, #tpu.memory_space<vmem>>, vector<8x4xf32>
    %c0_14 = arith.constant 0 : index
    %c0_15 = arith.constant 0 : index
    %14 = vector.load %arg7[%c0_14, %c0_15] : memref<8x1xf32, #tpu.memory_space<vmem>>, vector<8x1xf32>
    %15 = vector.shape_cast %14 : vector<8x1xf32> to vector<8x1xf32>
    %16 = vector.broadcast %15 : vector<8x1xf32> to vector<8x32xf32>
    %c0_16 = arith.constant 0 : index
    %c0_17 = arith.constant 0 : index
    %c0_18 = arith.constant 0 : index
    %17 = vector.load %arg1[%c0_16, %c0_17, %c0_18] : memref<2x4x16xf32, #tpu.memory_space<vmem>>, vector<2x4x16xf32>
    %18 = vector.extract_strided_slice %17 {offsets = [0, 0, 0], sizes = [1, 4, 16], strides = [1, 1, 1]} : vector<2x4x16xf32> to vector<1x4x16xf32>
    %19 = vector.shape_cast %18 : vector<1x4x16xf32> to vector<4x16xf32>
    %20 = vector.extract_strided_slice %17 {offsets = [1, 0, 0], sizes = [1, 4, 16], strides = [1, 1, 1]} : vector<2x4x16xf32> to vector<1x4x16xf32>
    %21 = vector.shape_cast %20 : vector<1x4x16xf32> to vector<4x16xf32>
    %22 = tpu.concatenate %19, %21 in 1 : vector<4x16xf32>, vector<4x16xf32> -> vector<4x32xf32>
    %23 = tpu.iota {dimensions = array<i32: 1>} : vector<1x32xi32>
    %c16_i32 = arith.constant 16 : i32
    %c0_i32 = arith.constant 0 : i32
    %24 = arith.cmpi eq, %c16_i32, %c0_i32 : i32
    %c1_i32 = arith.constant 1 : i32
    %25 = arith.select %24, %c1_i32, %c16_i32 : i32
    %26 = vector.broadcast %25 : i32 to vector<1x32xi32>
    %27 = arith.remsi %23, %26 : vector<1x32xi32>
    %c0_i32_19 = arith.constant 0 : i32
    %28 = vector.broadcast %c0_i32_19 : i32 to vector<1x32xi32>
    %29 = arith.cmpi ne, %27, %28 : vector<1x32xi32>
    %c0_i32_20 = arith.constant 0 : i32
    %30 = vector.broadcast %c0_i32_20 : i32 to vector<1x32xi32>
    %31 = arith.cmpi slt, %27, %30 : vector<1x32xi32>
    %c0_i32_21 = arith.constant 0 : i32
    %32 = arith.cmpi slt, %25, %c0_i32_21 : i32
    %33 = vector.broadcast %32 : i1 to vector<1x32xi1>
    %34 = vector.broadcast %33 : vector<1x32xi1> to vector<1x32xi1>
    %35 = arith.xori %31, %34 : vector<1x32xi1>
    %36 = arith.andi %35, %29 : vector<1x32xi1>
    %37 = vector.broadcast %25 : i32 to vector<1x32xi32>
    %38 = arith.addi %27, %37 : vector<1x32xi32>
    %39 = arith.select %36, %38, %27 : vector<1x32xi1>, vector<1x32xi32>
    %c-2_i32 = arith.constant -2 : i32
    %40 = vector.broadcast %c-2_i32 : i32 to vector<1x32xi32>
    %41 = arith.addi %39, %40 : vector<1x32xi32>
    %c0_i32_22 = arith.constant 0 : i32
    %42 = vector.broadcast %c0_i32_22 : i32 to vector<1x32xi32>
    %43 = arith.cmpi sge, %41, %42 : vector<1x32xi32>
    %c-2_i32_23 = arith.constant -2 : i32
    %44 = vector.broadcast %c-2_i32_23 : i32 to vector<1x32xi32>
    %45 = arith.addi %39, %44 : vector<1x32xi32>
    %c16_i32_24 = arith.constant 16 : i32
    %46 = vector.broadcast %c16_i32_24 : i32 to vector<1x32xi32>
    %47 = arith.cmpi slt, %45, %46 : vector<1x32xi32>
    %48 = arith.andi %43, %47 : vector<1x32xi1>
    %c2_i32 = arith.constant 2 : i32
    %49 = vector.broadcast %c2_i32 : i32 to vector<1x32xi32>
    %50 = arith.addi %39, %49 : vector<1x32xi32>
    %c0_i32_25 = arith.constant 0 : i32
    %51 = vector.broadcast %c0_i32_25 : i32 to vector<1x32xi32>
    %52 = arith.cmpi sge, %50, %51 : vector<1x32xi32>
    %c2_i32_26 = arith.constant 2 : i32
    %53 = vector.broadcast %c2_i32_26 : i32 to vector<1x32xi32>
    %54 = arith.addi %39, %53 : vector<1x32xi32>
    %c16_i32_27 = arith.constant 16 : i32
    %55 = vector.broadcast %c16_i32_27 : i32 to vector<1x32xi32>
    %56 = arith.cmpi slt, %54, %55 : vector<1x32xi32>
    %57 = arith.andi %52, %56 : vector<1x32xi1>
    %cst = arith.constant 0.000000e+00 : f32
    %58 = vector.broadcast %cst : f32 to vector<4x2xf32>
    %59 = vector.extract_strided_slice %22 {offsets = [0, 0], sizes = [4, 30], strides = [1, 1]} : vector<4x32xf32> to vector<4x30xf32>
    %60 = tpu.concatenate %58, %59 in 1 : vector<4x2xf32>, vector<4x30xf32> -> vector<4x32xf32>
    %cst_28 = arith.constant 0.000000e+00 : f32
    %61 = vector.shape_cast %48 : vector<1x32xi1> to vector<1x32xi1>
    %62 = vector.broadcast %61 : vector<1x32xi1> to vector<4x32xi1>
    %63 = vector.broadcast %cst_28 : f32 to vector<4x32xf32>
    %64 = arith.select %62, %60, %63 : vector<4x32xi1>, vector<4x32xf32>
    %65 = vector.extract_strided_slice %22 {offsets = [0, 2], sizes = [4, 30], strides = [1, 1]} : vector<4x32xf32> to vector<4x30xf32>
    %cst_29 = arith.constant 0.000000e+00 : f32
    %66 = vector.broadcast %cst_29 : f32 to vector<4x2xf32>
    %67 = tpu.concatenate %65, %66 in 1 : vector<4x30xf32>, vector<4x2xf32> -> vector<4x32xf32>
    %cst_30 = arith.constant 0.000000e+00 : f32
    %68 = vector.shape_cast %57 : vector<1x32xi1> to vector<1x32xi1>
    %69 = vector.broadcast %68 : vector<1x32xi1> to vector<4x32xi1>
    %70 = vector.broadcast %cst_30 : f32 to vector<4x32xf32>
    %71 = arith.select %69, %67, %70 : vector<4x32xi1>, vector<4x32xf32>
    %cst_31 = arith.constant dense<0.000000e+00> : vector<8x32xf32>
    %72 = tpu.matmul %1, %64, %cst_31 {dimension_numbers = #tpu.dot_dimension_numbers<[1], [0], [0], [1], [0, 0, 1, 1], [], []>} : vector<8x4xf32>, vector<4x32xf32>, vector<8x32xf32> -> vector<8x32xf32>
    %73 = arith.addf %9, %72 : vector<8x32xf32>
    %cst_32 = arith.constant dense<0.000000e+00> : vector<8x32xf32>
    %74 = tpu.matmul %3, %22, %cst_32 {dimension_numbers = #tpu.dot_dimension_numbers<[1], [0], [0], [1], [0, 0, 1, 1], [], []>} : vector<8x4xf32>, vector<4x32xf32>, vector<8x32xf32> -> vector<8x32xf32>
    %75 = arith.addf %73, %74 : vector<8x32xf32>
    %cst_33 = arith.constant dense<0.000000e+00> : vector<8x32xf32>
    %76 = tpu.matmul %5, %71, %cst_33 {dimension_numbers = #tpu.dot_dimension_numbers<[1], [0], [0], [1], [0, 0, 1, 1], [], []>} : vector<8x4xf32>, vector<4x32xf32>, vector<8x32xf32> -> vector<8x32xf32>
    %77 = arith.addf %75, %76 : vector<8x32xf32>
    %cst_34 = arith.constant 0.000000e+00 : f32
    %78 = vector.broadcast %cst_34 : f32 to vector<8x32xf32>
    %79 = arith.maximumf %77, %78 : vector<8x32xf32>
    %cst_35 = arith.constant 0.000000e+00 : f32
    %80 = vector.broadcast %cst_35 : f32 to vector<8x2xf32>
    %81 = vector.extract_strided_slice %79 {offsets = [0, 0], sizes = [8, 30], strides = [1, 1]} : vector<8x32xf32> to vector<8x30xf32>
    %82 = tpu.concatenate %80, %81 in 1 : vector<8x2xf32>, vector<8x30xf32> -> vector<8x32xf32>
    %cst_36 = arith.constant 0.000000e+00 : f32
    %83 = vector.shape_cast %48 : vector<1x32xi1> to vector<1x32xi1>
    %84 = vector.broadcast %83 : vector<1x32xi1> to vector<8x32xi1>
    %85 = vector.broadcast %cst_36 : f32 to vector<8x32xf32>
    %86 = arith.select %84, %82, %85 : vector<8x32xi1>, vector<8x32xf32>
    %87 = vector.extract_strided_slice %79 {offsets = [0, 2], sizes = [8, 30], strides = [1, 1]} : vector<8x32xf32> to vector<8x30xf32>
    %cst_37 = arith.constant 0.000000e+00 : f32
    %88 = vector.broadcast %cst_37 : f32 to vector<8x2xf32>
    %89 = tpu.concatenate %87, %88 in 1 : vector<8x30xf32>, vector<8x2xf32> -> vector<8x32xf32>
    %cst_38 = arith.constant 0.000000e+00 : f32
    %90 = vector.shape_cast %57 : vector<1x32xi1> to vector<1x32xi1>
    %91 = vector.broadcast %90 : vector<1x32xi1> to vector<8x32xi1>
    %92 = vector.broadcast %cst_38 : f32 to vector<8x32xf32>
    %93 = arith.select %91, %89, %92 : vector<8x32xi1>, vector<8x32xf32>
    %94 = tpu.concatenate %86, %79, %93 in 0 : vector<8x32xf32>, vector<8x32xf32>, vector<8x32xf32> -> vector<24x32xf32>
    %cst_39 = arith.constant dense<0.000000e+00> : vector<8x32xf32>
    %95 = tpu.matmul %6, %94, %cst_39 {dimension_numbers = #tpu.dot_dimension_numbers<[1], [0], [0], [1], [0, 0, 1, 1], [], []>} : vector<8x24xf32>, vector<24x32xf32>, vector<8x32xf32> -> vector<8x32xf32>
    %96 = arith.addf %95, %12 : vector<8x32xf32>
    %cst_40 = arith.constant 0.000000e+00 : f32
    %97 = vector.broadcast %cst_40 : f32 to vector<8x32xf32>
    %98 = arith.maximumf %96, %97 : vector<8x32xf32>
    %cst_41 = arith.constant dense<0.000000e+00> : vector<8x32xf32>
    %99 = tpu.matmul %13, %22, %cst_41 {dimension_numbers = #tpu.dot_dimension_numbers<[1], [0], [0], [1], [0, 0, 1, 1], [], []>} : vector<8x4xf32>, vector<4x32xf32>, vector<8x32xf32> -> vector<8x32xf32>
    %100 = arith.addf %99, %16 : vector<8x32xf32>
    %101 = arith.addf %98, %100 : vector<8x32xf32>
    %cst_42 = arith.constant 0.000000e+00 : f32
    %102 = vector.broadcast %cst_42 : f32 to vector<8x32xf32>
    %103 = arith.maximumf %101, %102 : vector<8x32xf32>
    %c0_43 = arith.constant 0 : index
    %c0_44 = arith.constant 0 : index
    %c0_45 = arith.constant 0 : index
    %104 = vector.load %arg8[%c0_43, %c0_44, %c0_45] : memref<1x8x32xf32, #tpu.memory_space<vmem>>, vector<1x8x32xf32>
    %105 = vector.shape_cast %104 : vector<1x8x32xf32> to vector<8x32xf32>
    %106 = vector.shape_cast %103 : vector<8x32xf32> to vector<1x8x32xf32>
    tpu.vector_store %arg8[%c0_43, %c0_44, %c0_45], %106 {strides = array<i32>} : memref<1x8x32xf32, #tpu.memory_space<vmem>>, vector<1x8x32xf32>,
    return
  }
  func.func @transform_0(%arg0: i32) -> (i32, i32, i32) {
    %c0_i32 = arith.constant 0 : i32
    %c0_i32_0 = arith.constant 0 : i32
    %c0_i32_1 = arith.constant 0 : i32
    return %arg0, %c0_i32, %c0_i32_0 : i32, i32, i32
  }
  func.func @transform_1(%arg0: i32) -> (i32, i32, i32) {
    %c0_i32 = arith.constant 0 : i32
    %c0_i32_0 = arith.constant 0 : i32
    %c0_i32_1 = arith.constant 0 : i32
    %c0_i32_2 = arith.constant 0 : i32
    return %c0_i32, %c0_i32_0, %c0_i32_1 : i32, i32, i32
  }
  func.func @transform_2(%arg0: i32) -> (i32, i32) {
    %c0_i32 = arith.constant 0 : i32
    %c0_i32_0 = arith.constant 0 : i32
    %c0_i32_1 = arith.constant 0 : i32
    return %c0_i32, %c0_i32_0 : i32, i32
  }
  func.func @transform_3(%arg0: i32) -> (i32, i32) {
    %c0_i32 = arith.constant 0 : i32
    %c0_i32_0 = arith.constant 0 : i32
    %c0_i32_1 = arith.constant 0 : i32
    return %c0_i32, %c0_i32_0 : i32, i32
  }
  func.func @transform_4(%arg0: i32) -> (i32, i32) {
    %c0_i32 = arith.constant 0 : i32
    %c0_i32_0 = arith.constant 0 : i32
    %c0_i32_1 = arith.constant 0 : i32
    return %c0_i32, %c0_i32_0 : i32, i32
  }
  func.func @transform_5(%arg0: i32) -> (i32, i32) {
    %c0_i32 = arith.constant 0 : i32
    %c0_i32_0 = arith.constant 0 : i32
    %c0_i32_1 = arith.constant 0 : i32
    return %c0_i32, %c0_i32_0 : i32, i32
  }
  func.func @transform_6(%arg0: i32) -> (i32, i32) {
    %c0_i32 = arith.constant 0 : i32
    %c0_i32_0 = arith.constant 0 : i32
    %c0_i32_1 = arith.constant 0 : i32
    return %c0_i32, %c0_i32_0 : i32, i32
  }
  func.func @transform_7(%arg0: i32) -> (i32, i32, i32) {
    %c0_i32 = arith.constant 0 : i32
    %c0_i32_0 = arith.constant 0 : i32
    %c0_i32_1 = arith.constant 0 : i32
    return %arg0, %c0_i32, %c0_i32_0 : i32, i32, i32
  }
}

</mosaic_0001>

<llo_original>
// kernel: tpu_custom_call.1
$region0: #{tpu_custom_call.1}
  #allocation0 [shape = 'u32[]', space=smem, size = 0x4, offset = 0x4, fixed_abs, tag = 'smem constant byte address 0x4 - core index']
  #allocation1 [shape = 'u32[144,128]{1,0:T(1,128)}', space=vmem, size = 0x12000, scoped, tag = 'internal scratch']
  %s0 = inlined_call_operand.vmem [shape: f32[2,4,16], index: 0, kind: input, shape index: {}]
  %s1 = inlined_call_operand.vmem [shape: f32[3,8,4], index: 1, kind: input, shape index: {}]
  %s2 = inlined_call_operand.vmem [shape: f32[8,1], index: 2, kind: input, shape index: {}]
  %s3 = inlined_call_operand.vmem [shape: f32[8,24], index: 3, kind: input, shape index: {}]
  %s4 = inlined_call_operand.vmem [shape: f32[8,1], index: 4, kind: input, shape index: {}]
  %s5 = inlined_call_operand.vmem [shape: f32[8,4], index: 5, kind: input, shape index: {}]
  %s6 = inlined_call_operand.vmem [shape: f32[8,1], index: 6, kind: input, shape index: {}]
  %s7 = inlined_call_operand.hbm [shape: f32[1,8,32], index: 7, kind: output, shape index: {}]
  %s8 = sld [smem:[#allocation0]]
  $region38: #{tpu_custom_call.1} parent=0
    _
  %s10 = ssub.s32 1, %s8
  %s11 = scalar_select 0, %s10, %s8
  $region1: #{tpu_custom_call.1} parent=0
    #allocation2 [shape = 'u8[4096]{0}', space=vmem, size = 0x1000, scoped, tag = 'output window, operand 0, single buffered']
    #allocation3 [shape = 's32[1]{0}', space=sflag, size = 0x4, scoped, tag = 'scoped memory for tpu_custom_call.1']
    %12 = vsyncpa [#allocation3], 0
    // Predicated region
    $region2: #{tpu_custom_call.1} parent=1 // pred_check
      _
    $region3: #{tpu_custom_call.1} parent=1 // pred_check_branch
      %14 = sbr.rel (0) target = $region5
    $region4: #{tpu_custom_call.1} parent=1 // pred_region
      _
    $region5: #{tpu_custom_call.1} parent=1 // pred_fallthru
      _
    // Predicated region
    $region6: #{tpu_custom_call.1} parent=1 // pred_check
      _
    $region7: #{tpu_custom_call.1} parent=1 // pred_check_branch
      %16 = sbr.rel (0) target = $region9
    $region8: #{tpu_custom_call.1} parent=1 // pred_region
      _
    $region9: #{tpu_custom_call.1} parent=1 // pred_fallthru
      _
    // Predicated region
    $region10: #{tpu_custom_call.1} parent=1 // pred_check
      _
    $region11: #{tpu_custom_call.1} parent=1 // pred_check_branch
      %18 = sbr.rel (0) target = $region13
    $region12: #{tpu_custom_call.1} parent=1 // pred_region
      _
    $region13: #{tpu_custom_call.1} parent=1 // pred_fallthru
      _
    // Predicated region
    $region14: #{tpu_custom_call.1} parent=1 // pred_check
      _
    $region15: #{tpu_custom_call.1} parent=1 // pred_check_branch
      %20 = sbr.rel (0) target = $region17
    $region16: #{tpu_custom_call.1} parent=1 // pred_region
      _
    $region17: #{tpu_custom_call.1} parent=1 // pred_fallthru
      _
    // Predicated region
    $region18: #{tpu_custom_call.1} parent=1 // pred_check
      _
    $region19: #{tpu_custom_call.1} parent=1 // pred_check_branch
      %22 = sbr.rel (0) target = $region21
    $region20: #{tpu_custom_call.1} parent=1 // pred_region
      _
    $region21: #{tpu_custom_call.1} parent=1 // pred_fallthru
      _
    // Predicated region
    $region22: #{tpu_custom_call.1} parent=1 // pred_check
      _
    $region23: #{tpu_custom_call.1} parent=1 // pred_check_branch
      %24 = sbr.rel (0) target = $region25
    $region24: #{tpu_custom_call.1} parent=1 // pred_region
      _
    $region25: #{tpu_custom_call.1} parent=1 // pred_fallthru
      _
    // Predicated region
    $region26: #{tpu_custom_call.1} parent=1 // pred_check
      _
    $region27: #{tpu_custom_call.1} parent=1 // pred_check_branch
      %26 = sbr.rel (0) target = $region29
    $region28: #{tpu_custom_call.1} parent=1 // pred_region
      _
    $region29: #{tpu_custom_call.1} parent=1 // pred_fallthru
      _
    %v27 = vld [vmem:[%s1] sm:$0xff]
    %s28 = scalar_lea.vmem %s1, 8
    %v29 = vld [vmem:[%s28] sm:$0xff]
    %s30 = scalar_lea.vmem %s1, 16
    %v31 = vld [vmem:[%s30] sm:$0xff]
    %v32 = vld [vmem:[%s3] sm:$0xff]
    %v33 = vld [vmem:[%s2] sm:$0xff]
    %35 = vset.pattern.permute.xlu0 0
    %36 = vperm.xlu0 %35, %v33
    %v37 = vpop.permute.xlu0 %36
    %v39 = vld [vmem:[%s4] sm:$0xff]
    %41 = vset.pattern.permute.xlu0 0
    %42 = vperm.xlu0 %41, %v39
    %v43 = vpop.permute.xlu0 %42
    %v45 = vld [vmem:[%s5] sm:$0xff]
    %v46 = vld [vmem:[%s6] sm:$0xff]
    %48 = vset.pattern.permute.xlu0 0
    %49 = vperm.xlu0 %48, %v46
    %v50 = vpop.permute.xlu0 %49
    %v52 = vld [vmem:[%s0] sm:$0xf]
    %v53 = vld [vmem:[%s0 + $0x4] sm:$0xf]
    %55 = vrot.lane.b32.xlu0 %v53, 16
    %v56 = vpop.permute.xlu0 %55
    %vm58 = vcmask 130048
    %v59 = vsel %vm58, %v52, %v56
    %v60 = vlaneseq
    %v61 = vand.u32 %v60, 127
    %vm62 = vcmp.lt.s32.totalorder %v61, 0
    %v63 = vsub.s32 0, %v61
    %v64 = vsel %vm62, %v63, %v61
    %v65 = vshrl.u32 %v64, 4
    %v66 = vand.u32 %v64, 15
    %v67 = vsub.s32 0, %v66
    %v68 = vsel %vm62, %v67, %v66
    %vm69 = vcmp.ne.s32.totalorder %v68, 0
    %vm70 = vcmp.lt.s32.totalorder %v68, 0
    %vm71 = vmand %vm70, %vm69
    %v72 = vadd.s32 %v68, 16
    %v73 = vsel %vm71, %v72, %v68
    %v74 = vadd.s32 %v73, 4294967294
    %vm75 = vcmp.ge.s32.totalorder %v74, 0
    %vm76 = vcmp.lt.s32.totalorder %v74, 16
    %vm77 = vmand %vm75, %vm76
    %v78 = vadd.s32 %v73, 2
    %vm79 = vcmp.ge.s32.totalorder %v78, 0
    %vm80 = vcmp.lt.s32.totalorder %v78, 16
    %vm81 = vmand %vm79, %vm80
    %83 = vrot.lane.b32.xlu0 %v59, 2
    %v84 = vpop.permute.xlu0 %83
    %vm86 = vcmask 15360
    %v87 = vsel %vm86, 0.0, %v84
    %v88 = vsel %vm77, 1, 0
    %vm89 = vcmp.eq.s32.totalorder %v88, 1
    %v90 = vsel %vm89, %v87, 0.0
    %91 = vrot.lane.b32.xlu0 %v59, 126
    %v92 = vpop.permute.xlu0 %91
    %vm94 = vcmask 244736
    %v95 = vsel %vm94, %v92, 0.0
    %v96 = vsel %vm81, 1, 0
    %vm97 = vcmp.eq.s32.totalorder %v96, 1
    %v98 = vsel %vm97, %v95, 0.0
    %vm99 = vcmask 31744
    %v101 = vsel %vm99, %v27, 0
    %vm103 = vcmask 1043456
    %v105 = vsel %vm103, %v90, 0
    %107 = vmatprep.subr.mxu0 0.0
    %108 = vmatpush1.msra.mxu0 %v105
    %109 = vmatprep.subr.mxu0 0.0
    %110 = vmatpush1.msra.mxu0 0.0
    %111 = vmatprep.subr.mxu0 0.0
    %112 = vmatpush1.msra.mxu0 0.0
    %113 = vmatprep.subr.mxu0 0.0
    %114 = vmatpush1.msra.mxu0 0.0
    %115 = vmatprep.subr.mxu0 0.0
    %116 = vmatpush1.msra.mxu0 0.0
    %117 = vmatprep.subr.mxu0 0.0
    %118 = vmatpush1.msra.mxu0 0.0
    %119 = vmatprep.subr.mxu0 0.0
    %120 = vmatpush1.msra.mxu0 0.0
    %121 = vmatprep.subr.mxu0 0.0
    %122 = vmatpush1.msra.mxu0 0.0
    %123 = vmatprep.subr.mxu0 0.0
    %124 = vmatpush1.msra.mxu0 0.0
    %125 = vmatprep.subr.mxu0 0.0
    %126 = vmatpush1.msra.mxu0 0.0
    %127 = vmatprep.subr.mxu0 0.0
    %128 = vmatpush1.msra.mxu0 0.0
    %129 = vmatprep.subr.mxu0 0.0
    %130 = vmatpush1.msra.mxu0 0.0
    %131 = vmatprep.subr.mxu0 0.0
    %132 = vmatpush1.msra.mxu0 0.0
    %133 = vmatprep.subr.mxu0 0.0
    %134 = vmatpush1.msra.mxu0 0.0
    %135 = vmatprep.subr.mxu0 0.0
    %136 = vmatpush1.msra.mxu0 0.0
    %137 = vmatprep.subr.mxu0 0.0
    %138 = vmatpush1.msra.mxu0 0.0
    %139 = vmatprep.subr.mxu0 0.0
    %140 = vmatpush1.msra.mxu0 0.0
    %141 = vmatprep.subr.mxu0 0.0
    %142 = vmatpush1.msra.mxu0 0.0
    %143 = vmatprep.subr.mxu0 0.0
    %144 = vmatpush1.msra.mxu0 0.0
    %145 = vmatprep.subr.mxu0 0.0
    %146 = vmatpush1.msra.mxu0 0.0
    %147 = vmatprep.subr.mxu0 0.0
    %148 = vmatpush1.msra.mxu0 0.0
    %149 = vmatprep.subr.mxu0 0.0
    %150 = vmatpush1.msra.mxu0 0.0
    %151 = vmatprep.subr.mxu0 0.0
    %152 = vmatpush1.msra.mxu0 0.0
    %153 = vmatprep.subr.mxu0 0.0
    %154 = vmatpush1.msra.mxu0 0.0
    %155 = vmatprep.subr.mxu0 0.0
    %156 = vmatpush1.msra.mxu0 0.0
    %157 = vmatprep.subr.mxu0 0.0
    %158 = vmatpush1.msra.mxu0 0.0
    %159 = vmatprep.subr.mxu0 0.0
    %160 = vmatpush1.msra.mxu0 0.0
    %161 = vmatprep.subr.mxu0 0.0
    %162 = vmatpush1.msra.mxu0 0.0
    %163 = vmatprep.subr.mxu0 0.0
    %164 = vmatpush1.msra.mxu0 0.0
    %165 = vmatprep.subr.mxu0 0.0
    %166 = vmatpush1.msra.mxu0 0.0
    %167 = vmatprep.subr.mxu0 0.0
    %168 = vmatpush1.msra.mxu0 0.0
    %169 = vmatprep.subr.mxu0 0.0
    %170 = vmatpush1.msra.mxu0 0.0
    %171 = vmatprep.mubr.f32.mxu0 0.0
    %172 = vmatmul.mubr.f32.gmra.mrb[0].mxu0 %v101
    %v173 = vpop.f32.mrb[0].mxu0
    %v174 = vadd.f32 0.0, %v173
    %v175 = vpop.f32.mrb[0].mxu0
    %176 = vdwg.mxu0
    %v177 = vadd.f32 %v37, %v174
    %v179 = vsel %vm99, %v29, 0
    %v181 = vsel %vm103, %v59, 0
    %183 = vmatprep.subr.mxu0 0.0
    %184 = vmatpush1.msra.mxu0 %v181
    %185 = vmatprep.subr.mxu0 0.0
    %186 = vmatpush1.msra.mxu0 0.0
    %187 = vmatprep.subr.mxu0 0.0
    %188 = vmatpush1.msra.mxu0 0.0
    %189 = vmatprep.subr.mxu0 0.0
    %190 = vmatpush1.msra.mxu0 0.0
    %191 = vmatprep.subr.mxu0 0.0
    %192 = vmatpush1.msra.mxu0 0.0
    %193 = vmatprep.subr.mxu0 0.0
    %194 = vmatpush1.msra.mxu0 0.0
    %195 = vmatprep.subr.mxu0 0.0
    %196 = vmatpush1.msra.mxu0 0.0
    %197 = vmatprep.subr.mxu0 0.0
    %198 = vmatpush1.msra.mxu0 0.0
    %199 = vmatprep.subr.mxu0 0.0
    %200 = vmatpush1.msra.mxu0 0.0
    %201 = vmatprep.subr.mxu0 0.0
    %202 = vmatpush1.msra.mxu0 0.0
    %203 = vmatprep.subr.mxu0 0.0
    %204 = vmatpush1.msra.mxu0 0.0
    %205 = vmatprep.subr.mxu0 0.0
    %206 = vmatpush1.msra.mxu0 0.0
    %207 = vmatprep.subr.mxu0 0.0
    %208 = vmatpush1.msra.mxu0 0.0
    %209 = vmatprep.subr.mxu0 0.0
    %210 = vmatpush1.msra.mxu0 0.0
    %211 = vmatprep.subr.mxu0 0.0
    %212 = vmatpush1.msra.mxu0 0.0
    %213 = vmatprep.subr.mxu0 0.0
    %214 = vmatpush1.msra.mxu0 0.0
    %215 = vmatprep.subr.mxu0 0.0
    %216 = vmatpush1.msra.mxu0 0.0
    %217 = vmatprep.subr.mxu0 0.0
    %218 = vmatpush1.msra.mxu0 0.0
    %219 = vmatprep.subr.mxu0 0.0
    %220 = vmatpush1.msra.mxu0 0.0
    %221 = vmatprep.subr.mxu0 0.0
    %222 = vmatpush1.msra.mxu0 0.0
    %223 = vmatprep.subr.mxu0 0.0
    %224 = vmatpush1.msra.mxu0 0.0
    %225 = vmatprep.subr.mxu0 0.0
    %226 = vmatpush1.msra.mxu0 0.0
    %227 = vmatprep.subr.mxu0 0.0
    %228 = vmatpush1.msra.mxu0 0.0
    %229 = vmatprep.subr.mxu0 0.0
    %230 = vmatpush1.msra.mxu0 0.0
    %231 = vmatprep.subr.mxu0 0.0
    %232 = vmatpush1.msra.mxu0 0.0
    %233 = vmatprep.subr.mxu0 0.0
    %234 = vmatpush1.msra.mxu0 0.0
    %235 = vmatprep.subr.mxu0 0.0
    %236 = vmatpush1.msra.mxu0 0.0
    %237 = vmatprep.subr.mxu0 0.0
    %238 = vmatpush1.msra.mxu0 0.0
    %239 = vmatprep.subr.mxu0 0.0
    %240 = vmatpush1.msra.mxu0 0.0
    %241 = vmatprep.subr.mxu0 0.0
    %242 = vmatpush1.msra.mxu0 0.0
    %243 = vmatprep.subr.mxu0 0.0
    %244 = vmatpush1.msra.mxu0 0.0
    %245 = vmatprep.subr.mxu0 0.0
    %246 = vmatpush1.msra.mxu0 0.0
    %247 = vmatprep.mubr.f32.mxu0 0.0
    %248 = vmatmul.mubr.f32.gmra.mrb[0].mxu0 %v179
    %v249 = vpop.f32.mrb[0].mxu0
    %v250 = vadd.f32 0.0, %v249
    %v251 = vpop.f32.mrb[0].mxu0
    %252 = vdwg.mxu0
    %v253 = vadd.f32 %v177, %v250
    %v255 = vsel %vm99, %v31, 0
    %v258 = vsel %vm103, %v98, 0
    %260 = vmatprep.subr.mxu0 0.0
    %261 = vmatpush1.msra.mxu0 %v258
    %262 = vmatprep.subr.mxu0 0.0
    %263 = vmatpush1.msra.mxu0 0.0
    %264 = vmatprep.subr.mxu0 0.0
    %265 = vmatpush1.msra.mxu0 0.0
    %266 = vmatprep.subr.mxu0 0.0
    %267 = vmatpush1.msra.mxu0 0.0
    %268 = vmatprep.subr.mxu0 0.0
    %269 = vmatpush1.msra.mxu0 0.0
    %270 = vmatprep.subr.mxu0 0.0
    %271 = vmatpush1.msra.mxu0 0.0
    %272 = vmatprep.subr.mxu0 0.0
    %273 = vmatpush1.msra.mxu0 0.0
    %274 = vmatprep.subr.mxu0 0.0
    %275 = vmatpush1.msra.mxu0 0.0
    %276 = vmatprep.subr.mxu0 0.0
    %277 = vmatpush1.msra.mxu0 0.0
    %278 = vmatprep.subr.mxu0 0.0
    %279 = vmatpush1.msra.mxu0 0.0
    %280 = vmatprep.subr.mxu0 0.0
    %281 = vmatpush1.msra.mxu0 0.0
    %282 = vmatprep.subr.mxu0 0.0
    %283 = vmatpush1.msra.mxu0 0.0
    %284 = vmatprep.subr.mxu0 0.0
    %285 = vmatpush1.msra.mxu0 0.0
    %286 = vmatprep.subr.mxu0 0.0
    %287 = vmatpush1.msra.mxu0 0.0
    %288 = vmatprep.subr.mxu0 0.0
    %289 = vmatpush1.msra.mxu0 0.0
    %290 = vmatprep.subr.mxu0 0.0
    %291 = vmatpush1.msra.mxu0 0.0
    %292 = vmatprep.subr.mxu0 0.0
    %293 = vmatpush1.msra.mxu0 0.0
    %294 = vmatprep.subr.mxu0 0.0
    %295 = vmatpush1.msra.mxu0 0.0
    %296 = vmatprep.subr.mxu0 0.0
    %297 = vmatpush1.msra.mxu0 0.0
    %298 = vmatprep.subr.mxu0 0.0
    %299 = vmatpush1.msra.mxu0 0.0
    %300 = vmatprep.subr.mxu0 0.0
    %301 = vmatpush1.msra.mxu0 0.0
    %302 = vmatprep.subr.mxu0 0.0
    %303 = vmatpush1.msra.mxu0 0.0
    %304 = vmatprep.subr.mxu0 0.0
    %305 = vmatpush1.msra.mxu0 0.0
    %306 = vmatprep.subr.mxu0 0.0
    %307 = vmatpush1.msra.mxu0 0.0
    %308 = vmatprep.subr.mxu0 0.0
    %309 = vmatpush1.msra.mxu0 0.0
    %310 = vmatprep.subr.mxu0 0.0
    %311 = vmatpush1.msra.mxu0 0.0
    %312 = vmatprep.subr.mxu0 0.0
    %313 = vmatpush1.msra.mxu0 0.0
    %314 = vmatprep.subr.mxu0 0.0
    %315 = vmatpush1.msra.mxu0 0.0
    %316 = vmatprep.subr.mxu0 0.0
    %317 = vmatpush1.msra.mxu0 0.0
    %318 = vmatprep.subr.mxu0 0.0
    %319 = vmatpush1.msra.mxu0 0.0
    %320 = vmatprep.subr.mxu0 0.0
    %321 = vmatpush1.msra.mxu0 0.0
    %322 = vmatprep.subr.mxu0 0.0
    %323 = vmatpush1.msra.mxu0 0.0
    %324 = vmatprep.mubr.f32.mxu0 0.0
    %325 = vmatmul.mubr.f32.gmra.mrb[0].mxu0 %v255
    %v326 = vpop.f32.mrb[0].mxu0
    %v327 = vadd.f32 0.0, %v326
    %v328 = vpop.f32.mrb[0].mxu0
    %329 = vdwg.mxu0
    %v330 = vadd.f32 %v253, %v327
    %v331 = vmax.f32 %v330, 0.0
    %333 = vrot.lane.b32.xlu0 %v331, 2
    %v334 = vpop.permute.xlu0 %333
    %v336 = vsel %vm86, 0.0, %v334
    %v337 = vsel %vm89, %v336, 0.0
    %338 = vrot.lane.b32.xlu0 %v331, 126
    %v339 = vpop.permute.xlu0 %338
    %v341 = vsel %vm94, %v339, 0.0
    %v342 = vsel %vm97, %v341, 0.0
    %vm343 = vcmask 195584
    %v345 = vsel %vm343, %v32, 0
    %347 = vmatprep.subr.mxu0 0.0
    %348 = vmatpush1.msra.mxu0 %v337
    %349 = vmatprep.subr.mxu0 0.0
    %350 = vmatpush1.msra.mxu0 %v331
    %351 = vmatprep.subr.mxu0 0.0
    %352 = vmatpush1.msra.mxu0 %v342
    %353 = vmatprep.subr.mxu0 0.0
    %354 = vmatpush1.msra.mxu0 0.0
    %355 = vmatprep.subr.mxu0 0.0
    %356 = vmatpush1.msra.mxu0 0.0
    %357 = vmatprep.subr.mxu0 0.0
    %358 = vmatpush1.msra.mxu0 0.0
    %359 = vmatprep.subr.mxu0 0.0
    %360 = vmatpush1.msra.mxu0 0.0
    %361 = vmatprep.subr.mxu0 0.0
    %362 = vmatpush1.msra.mxu0 0.0
    %363 = vmatprep.subr.mxu0 0.0
    %364 = vmatpush1.msra.mxu0 0.0
    %365 = vmatprep.subr.mxu0 0.0
    %366 = vmatpush1.msra.mxu0 0.0
    %367 = vmatprep.subr.mxu0 0.0
    %368 = vmatpush1.msra.mxu0 0.0
    %369 = vmatprep.subr.mxu0 0.0
    %370 = vmatpush1.msra.mxu0 0.0
    %371 = vmatprep.subr.mxu0 0.0
    %372 = vmatpush1.msra.mxu0 0.0
    %373 = vmatprep.subr.mxu0 0.0
    %374 = vmatpush1.msra.mxu0 0.0
    %375 = vmatprep.subr.mxu0 0.0
    %376 = vmatpush1.msra.mxu0 0.0
    %377 = vmatprep.subr.mxu0 0.0
    %378 = vmatpush1.msra.mxu0 0.0
    %379 = vmatprep.subr.mxu0 0.0
    %380 = vmatpush1.msra.mxu0 0.0
    %381 = vmatprep.subr.mxu0 0.0
    %382 = vmatpush1.msra.mxu0 0.0
    %383 = vmatprep.subr.mxu0 0.0
    %384 = vmatpush1.msra.mxu0 0.0
    %385 = vmatprep.subr.mxu0 0.0
    %386 = vmatpush1.msra.mxu0 0.0
    %387 = vmatprep.subr.mxu0 0.0
    %388 = vmatpush1.msra.mxu0 0.0
    %389 = vmatprep.subr.mxu0 0.0
    %390 = vmatpush1.msra.mxu0 0.0
    %391 = vmatprep.subr.mxu0 0.0
    %392 = vmatpush1.msra.mxu0 0.0
    %393 = vmatprep.subr.mxu0 0.0
    %394 = vmatpush1.msra.mxu0 0.0
    %395 = vmatprep.subr.mxu0 0.0
    %396 = vmatpush1.msra.mxu0 0.0
    %397 = vmatprep.subr.mxu0 0.0
    %398 = vmatpush1.msra.mxu0 0.0
    %399 = vmatprep.subr.mxu0 0.0
    %400 = vmatpush1.msra.mxu0 0.0
    %401 = vmatprep.subr.mxu0 0.0
    %402 = vmatpush1.msra.mxu0 0.0
    %403 = vmatprep.subr.mxu0 0.0
    %404 = vmatpush1.msra.mxu0 0.0
    %405 = vmatprep.subr.mxu0 0.0
    %406 = vmatpush1.msra.mxu0 0.0
    %407 = vmatprep.subr.mxu0 0.0
    %408 = vmatpush1.msra.mxu0 0.0
    %409 = vmatprep.subr.mxu0 0.0
    %410 = vmatpush1.msra.mxu0 0.0
    %411 = vmatprep.mubr.f32.mxu0 0.0
    %412 = vmatmul.mubr.f32.gmra.mrb[0].mxu0 %v345
    %v413 = vpop.f32.mrb[0].mxu0
    %v414 = vadd.f32 %v43, %v413
    %v415 = vpop.f32.mrb[0].mxu0
    %416 = vdwg.mxu0
    %v417 = vmax.f32 %v414, 0.0
    %v419 = vsel %vm99, %v45, 0
    %421 = vmatprep.subr.mxu0 0.0
    %422 = vmatpush1.msra.mxu0 %v181
    %423 = vmatprep.subr.mxu0 0.0
    %424 = vmatpush1.msra.mxu0 0.0
    %425 = vmatprep.subr.mxu0 0.0
    %426 = vmatpush1.msra.mxu0 0.0
    %427 = vmatprep.subr.mxu0 0.0
    %428 = vmatpush1.msra.mxu0 0.0
    %429 = vmatprep.subr.mxu0 0.0
    %430 = vmatpush1.msra.mxu0 0.0
    %431 = vmatprep.subr.mxu0 0.0
    %432 = vmatpush1.msra.mxu0 0.0
    %433 = vmatprep.subr.mxu0 0.0
    %434 = vmatpush1.msra.mxu0 0.0
    %435 = vmatprep.subr.mxu0 0.0
    %436 = vmatpush1.msra.mxu0 0.0
    %437 = vmatprep.subr.mxu0 0.0
    %438 = vmatpush1.msra.mxu0 0.0
    %439 = vmatprep.subr.mxu0 0.0
    %440 = vmatpush1.msra.mxu0 0.0
    %441 = vmatprep.subr.mxu0 0.0
    %442 = vmatpush1.msra.mxu0 0.0
    %443 = vmatprep.subr.mxu0 0.0
    %444 = vmatpush1.msra.mxu0 0.0
    %445 = vmatprep.subr.mxu0 0.0
    %446 = vmatpush1.msra.mxu0 0.0
    %447 = vmatprep.subr.mxu0 0.0
    %448 = vmatpush1.msra.mxu0 0.0
    %449 = vmatprep.subr.mxu0 0.0
    %450 = vmatpush1.msra.mxu0 0.0
    %451 = vmatprep.subr.mxu0 0.0
    %452 = vmatpush1.msra.mxu0 0.0
    %453 = vmatprep.subr.mxu0 0.0
    %454 = vmatpush1.msra.mxu0 0.0
    %455 = vmatprep.subr.mxu0 0.0
    %456 = vmatpush1.msra.mxu0 0.0
    %457 = vmatprep.subr.mxu0 0.0
    %458 = vmatpush1.msra.mxu0 0.0
    %459 = vmatprep.subr.mxu0 0.0
    %460 = vmatpush1.msra.mxu0 0.0
    %461 = vmatprep.subr.mxu0 0.0
    %462 = vmatpush1.msra.mxu0 0.0
    %463 = vmatprep.subr.mxu0 0.0
    %464 = vmatpush1.msra.mxu0 0.0
    %465 = vmatprep.subr.mxu0 0.0
    %466 = vmatpush1.msra.mxu0 0.0
    %467 = vmatprep.subr.mxu0 0.0
    %468 = vmatpush1.msra.mxu0 0.0
    %469 = vmatprep.subr.mxu0 0.0
    %470 = vmatpush1.msra.mxu0 0.0
    %471 = vmatprep.subr.mxu0 0.0
    %472 = vmatpush1.msra.mxu0 0.0
    %473 = vmatprep.subr.mxu0 0.0
    %474 = vmatpush1.msra.mxu0 0.0
    %475 = vmatprep.subr.mxu0 0.0
    %476 = vmatpush1.msra.mxu0 0.0
    %477 = vmatprep.subr.mxu0 0.0
    %478 = vmatpush1.msra.mxu0 0.0
    %479 = vmatprep.subr.mxu0 0.0
    %480 = vmatpush1.msra.mxu0 0.0
    %481 = vmatprep.subr.mxu0 0.0
    %482 = vmatpush1.msra.mxu0 0.0
    %483 = vmatprep.subr.mxu0 0.0
    %484 = vmatpush1.msra.mxu0 0.0
    %485 = vmatprep.mubr.f32.mxu0 0.0
    %486 = vmatmul.mubr.f32.gmra.mrb[0].mxu0 %v419
    %v487 = vpop.f32.mrb[0].mxu0
    %v488 = vadd.f32 %v50, %v487
    %v489 = vpop.f32.mrb[0].mxu0
    %490 = vdwg.mxu0
    %v491 = vadd.f32 %v417, %v488
    %v492 = vmax.f32 %v491, 0.0
    %vm493 = vcmask 261120
    %494 = vst.msk [vmem:[#allocation2] sm:$0xff] %vm493, %v492
    // Predicated region
    $region30: #{tpu_custom_call.1} parent=1 // pred_check
      _
    $region31: #{tpu_custom_call.1} parent=1 // pred_check_branch
      %496 = sbr.rel (0) target = $region33
    $region32: #{tpu_custom_call.1} parent=1 // pred_region
      %s498 = ssub.s32 128, 128
      %499 = vsyncadd [#allocation3], %s498
      %s501 = sshll.u32 [#allocation2], 4
      %s502 = int_to_ptr.vmem [resolvable:$true] %s501
      %504 = dma.vmem_to_hbm [thread:$0]  %s502, 128, %s7, [#allocation3]
    $region33: #{tpu_custom_call.1} parent=1 // pred_fallthru
      _
    // Predicated region
    $region34: #{tpu_custom_call.1} parent=1 // pred_check
      _
    $region35: #{tpu_custom_call.1} parent=1 // pred_check_branch
      %506 = sbr.rel (0) target = $region37
    $region36: #{tpu_custom_call.1} parent=1 // pred_region
      %507 = dma.done [#allocation3], 128
    $region37: #{tpu_custom_call.1} parent=1 // pred_fallthru
      _
    %508 = vsyncpa [#allocation3], 1

</llo_original>
